<compile_context>
chip_gen: v6e
topology: v6e:2x2x1
jax: 0.10.0
libtpu: 0.0.40
codegen_flags: <defaults>
</compile_context>

<pallas_src>
import jax
import jax.numpy as jnp
from jax.experimental import pallas as pl
from jax.experimental.pallas import tpu as pltpu

IN_FEATURES = 29
H1, H2, OUT = 200, 100, 1
H1_PAD, H2_PAD = 256, 128          # (8,128)-aligned hidden widths


def _round_up(n, m):
    return ((n + m - 1) // m) * m


def _mlp_kernel(xt_ref, w1_ref, b1_ref, w2_ref, b2_ref, w3_ref, b3_ref, o_ref):
    xt = xt_ref[...]                                          # (29, TB) bf16

    # layer_1: (256,29) @ (29,TB) on MXU, f32 accumulate; bias+ReLU in f32.
    h1 = jnp.dot(w1_ref[...], xt, preferred_element_type=jnp.float32)
    h1 = jnp.maximum(h1 + b1_ref[...], 0.0)                   # (256, TB) f32

    # layer_2: (128,256) @ (256,TB) on MXU, f32 accumulate; bias+ReLU in f32.
    h2 = jnp.dot(w2_ref[...], h1.astype(jnp.bfloat16),
                 preferred_element_type=jnp.float32)
    h2 = jnp.maximum(h2 + b2_ref[...], 0.0)                   # (128, TB) f32

    # layer_3 (out_features=1): f32 VPU multiply + sublane reduce.  Batch is
    # already on the lane axis, so the (1, TB) result is lane-dense with no
    # transpose anywhere in the kernel.
    out = jnp.sum(h2 * w3_ref[...], axis=0, keepdims=True) + b3_ref[...]
    o_ref[...] = out.astype(o_ref.dtype)                      # (1, TB)


def prepare_params(params):
    """PyTorch-layout params -> kernel layout: kept in (out, in) orientation,
    zero-padded to aligned widths, matmul weights cast to bf16, biases as
    f32 column vectors (hidden on the sublane axis)."""
    f32, bf16 = jnp.float32, jnp.bfloat16
    w1, b1 = params["w1"].astype(f32), params["b1"].reshape(-1, 1).astype(f32)
    w2, b2 = params["w2"].astype(f32), params["b2"].reshape(-1, 1).astype(f32)
    w3, b3 = params["w3"].astype(f32), params["b3"].reshape(-1, 1).astype(f32)

    w1p = jnp.pad(w1, ((0, H1_PAD - H1), (0, 0))).astype(bf16)              # (256, 29)
    b1p = jnp.pad(b1, ((0, H1_PAD - H1), (0, 0)))                           # (256, 1)
    w2p = jnp.pad(w2, ((0, H2_PAD - H2), (0, H1_PAD - H1))).astype(bf16)    # (128, 256)
    b2p = jnp.pad(b2, ((0, H2_PAD - H2), (0, 0)))                           # (128, 1)
    w3p = jnp.pad(w3.T, ((0, H2_PAD - H2), (0, 0)))                         # (128, 1) f32
    return dict(w1=w1p, b1=b1p, w2=w2p, b2=b2p, w3=w3p, b3=b3)              # b3: (1,1) f32


def interruption_model_forward(x, prepared, *, block_b=2048):
    """x: (B, 29). prepared: output of prepare_params. Returns (B, 1) f32."""
    B, K = x.shape
    assert K == IN_FEATURES

    # Batch tile: multiple of 128 (lane-dense output, aligned bf16 x^T tile).
    # Capped at round_up(ceil(B/2), 128) so moderate B keeps >= 2 tiles for
    # v7x's two TensorCores; block_b=2048 keeps per-tile intermediates
    # (~2.8 KiB/row, h1 f32 dominates) around 6 MiB -> fits v5e/v6e/v7x VMEM.
    tb = max(128, min(_round_up(block_b, 128),
                      _round_up(pl.cdiv(B, 2), 128)))
    padded_b = _round_up(B, tb)
    n_tiles = padded_b // tb

    # Single wrapper prep op-chain: pad batch, transpose to batch-on-lanes,
    # cast to bf16 for the MXU.
    x_t = jnp.pad(x, ((0, padded_b - B), (0, 0))).T.astype(jnp.bfloat16)   # (29, padded_b)

    w1p, b1p = prepared["w1"], prepared["b1"]
    w2p, b2p = prepared["w2"], prepared["b2"]
    w3p, b3p = prepared["w3"], prepared["b3"]

    resident = lambda a: pl.BlockSpec(a.shape, lambda i: (0,) * a.ndim)

    param_bytes = sum(int(a.size) * a.dtype.itemsize
                      for a in (w1p, b1p, w2p, b2p, w3p, b3p))
    cost = pl.CostEstimate(
        flops=2 * padded_b * (IN_FEATURES * H1_PAD + H1_PAD * H2_PAD + H2_PAD * OUT),
        transcendentals=0,
        bytes_accessed=int(x_t.size) * 2 + padded_b * 4 + param_bytes)

    out = pl.pallas_call(
        _mlp_kernel,
        out_shape=jax.ShapeDtypeStruct((1, padded_b), jnp.float32),
        grid=(n_tiles,),
        in_specs=[pl.BlockSpec((IN_FEATURES, tb), lambda i: (0, i)),
                  resident(w1p), resident(b1p),
                  resident(w2p), resident(b2p),
                  resident(w3p), resident(b3p)],
        out_specs=pl.BlockSpec((1, tb), lambda i: (0, i)),
        compiler_params=pltpu.CompilerParams(
            dimension_semantics=("parallel",),
            vmem_limit_bytes=32 * 1024 * 1024),
        cost_estimate=cost,
    )(x_t, w1p, b1p, w2p, b2p, w3p, b3p)

    # lane-dense (1, padded_B) row -> (B, 1) column, dropping batch padding.
    return out.reshape(padded_b, 1)[:B]


def init_params(key):
    """PyTorch-shaped params with nn.Linear's default fan_in-uniform init."""
    def linear(k, fan_in, fan_out):
        kw, kb = jax.random.split(k)
        bound = 1.0 / jnp.sqrt(jnp.float32(fan_in))
        w = jax.random.uniform(kw, (fan_out, fan_in), jnp.float32, -bound, bound)
        b = jax.random.uniform(kb, (1, fan_out), jnp.float32, -bound, bound)
        return w, b

    k1, k2, k3 = jax.random.split(key, 3)
    w1, b1 = linear(k1, IN_FEATURES, H1)
    w2, b2 = linear(k2, H1, H2)
    w3, b3 = linear(k3, H2, OUT)
    return dict(w1=w1, b1=b1, w2=w2, b2=b2, w3=w3, b3=b3)


def _reference_forward_f32(x, p):
    dot = lambda a, b: jnp.dot(a, b, precision=jax.lax.Precision.HIGHEST)
    h = jnp.maximum(dot(x, p["w1"].T) + p["b1"], 0.0)
    h = jnp.maximum(dot(h, p["w2"].T) + p["b2"], 0.0)
    return dot(h, p["w3"].T) + p["b3"]


def _reference_forward_bf16(x, p):
    """Reference matching the kernel's bf16-operand / f32-accumulate scheme
    (layer 3 stays fully f32, as in the kernel)."""
    c = lambda a: a.astype(jnp.bfloat16).astype(jnp.float32)
    dot = lambda a, b: jnp.dot(a, b, precision=jax.lax.Precision.HIGHEST)
    h = jnp.maximum(dot(c(x), c(p["w1"]).T) + p["b1"], 0.0)
    h = jnp.maximum(dot(c(h), c(p["w2"]).T) + p["b2"], 0.0)
    return dot(h, p["w3"].T) + p["b3"]


if __name__ == "__main__":
    key = jax.random.PRNGKey(0)
    kx, kp = jax.random.split(key)

    B = 8
    x = jax.random.normal(kx, (B, IN_FEATURES), jnp.float32)
    params = init_params(kp)
    prepared = prepare_params(params)

    out = interruption_model_forward(x, prepared)
    out = jax.block_until_ready(out)

    assert out.shape == (B, 1)
    ref_bf16 = _reference_forward_bf16(x, params)
    ref_f32 = _reference_forward_f32(x, params)
    assert jnp.allclose(out, ref_bf16, atol=2e-3, rtol=2e-3), "mismatch vs bf16-matched reference"
    assert jnp.allclose(out, ref_f32, atol=5e-2, rtol=5e-2), "mismatch vs f32 reference"

    print("KERNEL_OK")
</pallas_src>

<mosaic_0001>
module attributes {stable_mosaic.version = 11 : i64} {
  func.func @_mlp_kernel(%arg0: i32, %arg1: memref<29x128xbf16, #tpu.memory_space<vmem>>, %arg2: memref<256x29xbf16, #tpu.memory_space<vmem>>, %arg3: memref<256x1xf32, #tpu.memory_space<vmem>>, %arg4: memref<128x256xbf16, #tpu.memory_space<vmem>>, %arg5: memref<128x1xf32, #tpu.memory_space<vmem>>, %arg6: memref<128x1xf32, #tpu.memory_space<vmem>>, %arg7: memref<1x1xf32, #tpu.memory_space<vmem>>, %arg8: memref<1x128xf32, #tpu.memory_space<vmem>>) attributes {dimension_semantics = [#tpu.dimension_semantics<parallel>], iteration_bounds = array<i64: 1>, scalar_prefetch = 0 : i64, scratch_operands = 0 : i64, tpu.core_type = #tpu.core_type<tc>, window_params = [{transform_indices = @transform_0, window_bounds = array<i64: 29, 128>}, {pipeline_mode = #tpu.pipeline_mode<synchronous>, transform_indices = @transform_1, window_bounds = array<i64: 256, 29>}, {pipeline_mode = #tpu.pipeline_mode<synchronous>, transform_indices = @transform_2, window_bounds = array<i64: 256, 1>}, {pipeline_mode = #tpu.pipeline_mode<synchronous>, transform_indices = @transform_3, window_bounds = array<i64: 128, 256>}, {pipeline_mode = #tpu.pipeline_mode<synchronous>, transform_indices = @transform_4, window_bounds = array<i64: 128, 1>}, {pipeline_mode = #tpu.pipeline_mode<synchronous>, transform_indices = @transform_5, window_bounds = array<i64: 128, 1>}, {pipeline_mode = #tpu.pipeline_mode<synchronous>, transform_indices = @transform_6, window_bounds = array<i64: 1, 1>}, {transform_indices = @transform_7, window_bounds = array<i64: 1, 128>}]} {
    %c0 = arith.constant 0 : index
    %c0_0 = arith.constant 0 : index
    %0 = vector.load %arg1[%c0, %c0_0] : memref<29x128xbf16, #tpu.memory_space<vmem>>, vector<29x128xbf16>
    %c0_1 = arith.constant 0 : index
    %c0_2 = arith.constant 0 : index
    %1 = vector.load %arg2[%c0_1, %c0_2] : memref<256x29xbf16, #tpu.memory_space<vmem>>, vector<256x29xbf16>
    %cst = arith.constant dense<0.000000e+00> : vector<256x128xf32>
    %2 = tpu.matmul %1, %0, %cst {dimension_numbers = #tpu.dot_dimension_numbers<[1], [0], [0], [1], [0, 0, 1, 1], [], []>} : vector<256x29xbf16>, vector<29x128xbf16>, vector<256x128xf32> -> vector<256x128xf32>
    %c0_3 = arith.constant 0 : index
    %c0_4 = arith.constant 0 : index
    %3 = vector.load %arg3[%c0_3, %c0_4] : memref<256x1xf32, #tpu.memory_space<vmem>>, vector<256x1xf32>
    %4 = vector.broadcast %3 : vector<256x1xf32> to vector<256x128xf32>
    %5 = arith.addf %2, %4 : vector<256x128xf32>
    %cst_5 = arith.constant 0.000000e+00 : f32
    %6 = vector.broadcast %cst_5 : f32 to vector<256x128xf32>
    %7 = arith.maximumf %5, %6 : vector<256x128xf32>
    %c0_6 = arith.constant 0 : index
    %c0_7 = arith.constant 0 : index
    %8 = vector.load %arg4[%c0_6, %c0_7] : memref<128x256xbf16, #tpu.memory_space<vmem>>, vector<128x256xbf16>
    %9 = arith.truncf %7 : vector<256x128xf32> to vector<256x128xbf16>
    %cst_8 = arith.constant dense<0.000000e+00> : vector<128x128xf32>
    %10 = tpu.matmul %8, %9, %cst_8 {dimension_numbers = #tpu.dot_dimension_numbers<[1], [0], [0], [1], [0, 0, 1, 1], [], []>} : vector<128x256xbf16>, vector<256x128xbf16>, vector<128x128xf32> -> vector<128x128xf32>
    %c0_9 = arith.constant 0 : index
    %c0_10 = arith.constant 0 : index
    %11 = vector.load %arg5[%c0_9, %c0_10] : memref<128x1xf32, #tpu.memory_space<vmem>>, vector<128x1xf32>
    %12 = vector.broadcast %11 : vector<128x1xf32> to vector<128x128xf32>
    %13 = arith.addf %10, %12 : vector<128x128xf32>
    %cst_11 = arith.constant 0.000000e+00 : f32
    %14 = vector.broadcast %cst_11 : f32 to vector<128x128xf32>
    %15 = arith.maximumf %13, %14 : vector<128x128xf32>
    %c0_12 = arith.constant 0 : index
    %c0_13 = arith.constant 0 : index
    %16 = vector.load %arg6[%c0_12, %c0_13] : memref<128x1xf32, #tpu.memory_space<vmem>>, vector<128x1xf32>
    %17 = vector.broadcast %16 : vector<128x1xf32> to vector<128x128xf32>
    %18 = arith.mulf %15, %17 : vector<128x128xf32>
    %cst_14 = arith.constant dense<0.000000e+00> : vector<128xf32>
    %19 = vector.multi_reduction <add>, %18, %cst_14 [0] : vector<128x128xf32> to vector<128xf32>
    %20 = vector.shape_cast %19 : vector<128xf32> to vector<1x128xf32>
    %c0_15 = arith.constant 0 : index
    %c0_16 = arith.constant 0 : index
    %21 = vector.load %arg7[%c0_15, %c0_16] : memref<1x1xf32, #tpu.memory_space<vmem>>, vector<1x1xf32>
    %22 = vector.broadcast %21 : vector<1x1xf32> to vector<1x128xf32>
    %23 = arith.addf %20, %22 : vector<1x128xf32>
    %c0_17 = arith.constant 0 : index
    %c0_18 = arith.constant 0 : index
    %24 = vector.load %arg8[%c0_17, %c0_18] : memref<1x128xf32, #tpu.memory_space<vmem>>, vector<1x128xf32>
    tpu.vector_store %arg8[%c0_17, %c0_18], %23 {strides = array<i32>} : memref<1x128xf32, #tpu.memory_space<vmem>>, vector<1x128xf32>,
    return
  }
  func.func @transform_0(%arg0: i32) -> (i32, i32) {
    %c0_i32 = arith.constant 0 : i32
    %c0_i32_0 = arith.constant 0 : i32
    return %c0_i32, %arg0 : i32, i32
  }
  func.func @transform_1(%arg0: i32) -> (i32, i32) {
    %c0_i32 = arith.constant 0 : i32
    %c0_i32_0 = arith.constant 0 : i32
    %c0_i32_1 = arith.constant 0 : i32
    return %c0_i32, %c0_i32_0 : i32, i32
  }
  func.func @transform_2(%arg0: i32) -> (i32, i32) {
    %c0_i32 = arith.constant 0 : i32
    %c0_i32_0 = arith.constant 0 : i32
    %c0_i32_1 = arith.constant 0 : i32
    return %c0_i32, %c0_i32_0 : i32, i32
  }
  func.func @transform_3(%arg0: i32) -> (i32, i32) {
    %c0_i32 = arith.constant 0 : i32
    %c0_i32_0 = arith.constant 0 : i32
    %c0_i32_1 = arith.constant 0 : i32
    return %c0_i32, %c0_i32_0 : i32, i32
  }
  func.func @transform_4(%arg0: i32) -> (i32, i32) {
    %c0_i32 = arith.constant 0 : i32
    %c0_i32_0 = arith.constant 0 : i32
    %c0_i32_1 = arith.constant 0 : i32
    return %c0_i32, %c0_i32_0 : i32, i32
  }
  func.func @transform_5(%arg0: i32) -> (i32, i32) {
    %c0_i32 = arith.constant 0 : i32
    %c0_i32_0 = arith.constant 0 : i32
    %c0_i32_1 = arith.constant 0 : i32
    return %c0_i32, %c0_i32_0 : i32, i32
  }
  func.func @transform_6(%arg0: i32) -> (i32, i32) {
    %c0_i32 = arith.constant 0 : i32
    %c0_i32_0 = arith.constant 0 : i32
    %c0_i32_1 = arith.constant 0 : i32
    return %c0_i32, %c0_i32_0 : i32, i32
  }
  func.func @transform_7(%arg0: i32) -> (i32, i32) {
    %c0_i32 = arith.constant 0 : i32
    %c0_i32_0 = arith.constant 0 : i32
    return %c0_i32, %arg0 : i32, i32
  }
}

</mosaic_0001>

<llo_original>
// kernel: tpu_custom_call.1
$region0: #{tpu_custom_call.1}
  #allocation0 [shape = 'u32[]', space=smem, size = 0x4, offset = 0x4, fixed_abs, tag = 'smem constant byte address 0x4 - core index']
  #allocation1 [shape = 'u32[144,128]{1,0:T(1,128)}', space=vmem, size = 0x12000, scoped, tag = 'internal scratch']
  #allocation2 [shape = 'f32[1,1]{1,0:T(1,128)S(1)}', space=vmem, size = 0x200, scoped, tag = 'scoped memory for tpu_custom_call.1']
  %s0 = inlined_call_operand.vmem [shape: bf16[29,128], index: 0, kind: input, shape index: {}]
  %s1 = inlined_call_operand.vmem [shape: bf16[256,29], index: 1, kind: input, shape index: {}]
  %s2 = inlined_call_operand.vmem [shape: f32[256,1], index: 2, kind: input, shape index: {}]
  %s3 = inlined_call_operand.vmem [shape: bf16[128,256], index: 3, kind: input, shape index: {}]
  %s4 = inlined_call_operand.vmem [shape: f32[128,1], index: 4, kind: input, shape index: {}]
  %s5 = inlined_call_operand.vmem [shape: f32[128,1], index: 5, kind: input, shape index: {}]
  %s6 = inlined_call_operand.<no memory space> [shape: f32[1,1], index: 6, kind: input, shape index: {}]
  %s7 = inlined_call_operand.hbm [shape: f32[1,128], index: 7, kind: output, shape index: {}]
  %s8 = sld [smem:[#allocation0]]
  $region38: #{tpu_custom_call.1} parent=0
    _
  %s10 = ssub.s32 1, %s8
  %s11 = scalar_select 0, %s10, %s8
  %v12 = vstv %s6
  %13 = vst [vmem:[#allocation2] sm:$0x1] %v12
  $region1: #{tpu_custom_call.1} parent=0
    #allocation3 [shape = 'u8[512]{0}', space=vmem, size = 0x400, scoped, tag = 'output window, operand 0, single buffered']
    #allocation4 [shape = 's32[1]{0}', space=sflag, size = 0x4, scoped, tag = 'scoped memory for tpu_custom_call.1']
    %14 = vsyncpa [#allocation4], 0
    // Predicated region
    $region2: #{tpu_custom_call.1} parent=1 // pred_check
      _
    $region3: #{tpu_custom_call.1} parent=1 // pred_check_branch
      %16 = sbr.rel (0) target = $region5
    $region4: #{tpu_custom_call.1} parent=1 // pred_region
      _
    $region5: #{tpu_custom_call.1} parent=1 // pred_fallthru
      _
    // Predicated region
    $region6: #{tpu_custom_call.1} parent=1 // pred_check
      _
    $region7: #{tpu_custom_call.1} parent=1 // pred_check_branch
      %18 = sbr.rel (0) target = $region9
    $region8: #{tpu_custom_call.1} parent=1 // pred_region
      _
    $region9: #{tpu_custom_call.1} parent=1 // pred_fallthru
      _
    // Predicated region
    $region10: #{tpu_custom_call.1} parent=1 // pred_check
      _
    $region11: #{tpu_custom_call.1} parent=1 // pred_check_branch
      %20 = sbr.rel (0) target = $region13
    $region12: #{tpu_custom_call.1} parent=1 // pred_region
      _
    $region13: #{tpu_custom_call.1} parent=1 // pred_fallthru
      _
    // Predicated region
    $region14: #{tpu_custom_call.1} parent=1 // pred_check
      _
    $region15: #{tpu_custom_call.1} parent=1 // pred_check_branch
      %22 = sbr.rel (0) target = $region17
    $region16: #{tpu_custom_call.1} parent=1 // pred_region
      _
    $region17: #{tpu_custom_call.1} parent=1 // pred_fallthru
      _
    // Predicated region
    $region18: #{tpu_custom_call.1} parent=1 // pred_check
      _
    $region19: #{tpu_custom_call.1} parent=1 // pred_check_branch
      %24 = sbr.rel (0) target = $region21
    $region20: #{tpu_custom_call.1} parent=1 // pred_region
      _
    $region21: #{tpu_custom_call.1} parent=1 // pred_fallthru
      _
    // Predicated region
    $region22: #{tpu_custom_call.1} parent=1 // pred_check
      _
    $region23: #{tpu_custom_call.1} parent=1 // pred_check_branch
      %26 = sbr.rel (0) target = $region25
    $region24: #{tpu_custom_call.1} parent=1 // pred_region
      _
    $region25: #{tpu_custom_call.1} parent=1 // pred_fallthru
      _
    // Predicated region
    $region26: #{tpu_custom_call.1} parent=1 // pred_check
      _
    $region27: #{tpu_custom_call.1} parent=1 // pred_check_branch
      %28 = sbr.rel (0) target = $region29
    $region28: #{tpu_custom_call.1} parent=1 // pred_region
      _
    $region29: #{tpu_custom_call.1} parent=1 // pred_fallthru
      _
    %v30 = vld [vmem:[%s0] sm:$0xf]
    %v31 = vld [vmem:[%s0 + $0x4] sm:$0xf]
    %v32 = vld [vmem:[%s0 + $0x8] sm:$0xf]
    %v33 = vld [vmem:[%s0 + $0xc] sm:$0x7]
    %v34 = vld [vmem:[%s1] sm:$0xf]
    %v35 = vld [vmem:[%s1 + $0x4] sm:$0xf]
    %v36 = vld [vmem:[%s1 + $0x8] sm:$0xf]
    %v37 = vld [vmem:[%s1 + $0xc] sm:$0xf]
    %v38 = vld [vmem:[%s1 + $0x10] sm:$0xf]
    %v39 = vld [vmem:[%s1 + $0x14] sm:$0xf]
    %v40 = vld [vmem:[%s1 + $0x18] sm:$0xf]
    %v41 = vld [vmem:[%s1 + $0x1c] sm:$0xf]
    %v42 = vld [vmem:[%s1 + $0x20] sm:$0xf]
    %v43 = vld [vmem:[%s1 + $0x24] sm:$0xf]
    %v44 = vld [vmem:[%s1 + $0x28] sm:$0xf]
    %v45 = vld [vmem:[%s1 + $0x2c] sm:$0xf]
    %v46 = vld [vmem:[%s1 + $0x30] sm:$0xf]
    %v47 = vld [vmem:[%s1 + $0x34] sm:$0xf]
    %v48 = vld [vmem:[%s1 + $0x38] sm:$0xf]
    %v49 = vld [vmem:[%s1 + $0x3c] sm:$0xf]
    %v50 = vld [vmem:[%s1 + $0x40] sm:$0xf]
    %v51 = vld [vmem:[%s1 + $0x44] sm:$0xf]
    %v52 = vld [vmem:[%s1 + $0x48] sm:$0xf]
    %v53 = vld [vmem:[%s1 + $0x4c] sm:$0xf]
    %v54 = vld [vmem:[%s1 + $0x50] sm:$0xf]
    %v55 = vld [vmem:[%s1 + $0x54] sm:$0xf]
    %v56 = vld [vmem:[%s1 + $0x58] sm:$0xf]
    %v57 = vld [vmem:[%s1 + $0x5c] sm:$0xf]
    %v58 = vld [vmem:[%s1 + $0x60] sm:$0xf]
    %v59 = vld [vmem:[%s1 + $0x64] sm:$0xf]
    %v60 = vld [vmem:[%s1 + $0x68] sm:$0xf]
    %v61 = vld [vmem:[%s1 + $0x6c] sm:$0xf]
    %v62 = vld [vmem:[%s1 + $0x70] sm:$0xf]
    %v63 = vld [vmem:[%s1 + $0x74] sm:$0xf]
    %v64 = vld [vmem:[%s1 + $0x78] sm:$0xf]
    %v65 = vld [vmem:[%s1 + $0x7c] sm:$0xf]
    %v66 = vld [vmem:[%s2] sm:$0xff]
    %v67 = vld [vmem:[%s2 + $0x8] sm:$0xff]
    %v68 = vld [vmem:[%s2 + $0x10] sm:$0xff]
    %v69 = vld [vmem:[%s2 + $0x18] sm:$0xff]
    %v70 = vld [vmem:[%s2 + $0x20] sm:$0xff]
    %v71 = vld [vmem:[%s2 + $0x28] sm:$0xff]
    %v72 = vld [vmem:[%s2 + $0x30] sm:$0xff]
    %v73 = vld [vmem:[%s2 + $0x38] sm:$0xff]
    %v74 = vld [vmem:[%s2 + $0x40] sm:$0xff]
    %v75 = vld [vmem:[%s2 + $0x48] sm:$0xff]
    %v76 = vld [vmem:[%s2 + $0x50] sm:$0xff]
    %v77 = vld [vmem:[%s2 + $0x58] sm:$0xff]
    %v78 = vld [vmem:[%s2 + $0x60] sm:$0xff]
    %v79 = vld [vmem:[%s2 + $0x68] sm:$0xff]
    %v80 = vld [vmem:[%s2 + $0x70] sm:$0xff]
    %v81 = vld [vmem:[%s2 + $0x78] sm:$0xff]
    %v82 = vld [vmem:[%s2 + $0x80] sm:$0xff]
    %v83 = vld [vmem:[%s2 + $0x88] sm:$0xff]
    %v84 = vld [vmem:[%s2 + $0x90] sm:$0xff]
    %v85 = vld [vmem:[%s2 + $0x98] sm:$0xff]
    %v86 = vld [vmem:[%s2 + $0xa0] sm:$0xff]
    %v87 = vld [vmem:[%s2 + $0xa8] sm:$0xff]
    %v88 = vld [vmem:[%s2 + $0xb0] sm:$0xff]
    %v89 = vld [vmem:[%s2 + $0xb8] sm:$0xff]
    %v90 = vld [vmem:[%s2 + $0xc0] sm:$0xff]
    %v91 = vld [vmem:[%s2 + $0xc8] sm:$0xff]
    %v92 = vld [vmem:[%s2 + $0xd0] sm:$0xff]
    %v93 = vld [vmem:[%s2 + $0xd8] sm:$0xff]
    %v94 = vld [vmem:[%s2 + $0xe0] sm:$0xff]
    %v95 = vld [vmem:[%s2 + $0xe8] sm:$0xff]
    %v96 = vld [vmem:[%s2 + $0xf0] sm:$0xff]
    %v97 = vld [vmem:[%s2 + $0xf8] sm:$0xff]
    %99 = vset.pattern.permute.xlu0 0
    %100 = vperm.xlu0 %99, %v66
    %v101 = vpop.permute.xlu0 %100
    %104 = vset.pattern.permute.xlu0 0
    %105 = vperm.xlu0 %104, %v67
    %v106 = vpop.permute.xlu0 %105
    %109 = vset.pattern.permute.xlu0 0
    %110 = vperm.xlu0 %109, %v68
    %v111 = vpop.permute.xlu0 %110
    %114 = vset.pattern.permute.xlu0 0
    %115 = vperm.xlu0 %114, %v69
    %v116 = vpop.permute.xlu0 %115
    %119 = vset.pattern.permute.xlu0 0
    %120 = vperm.xlu0 %119, %v70
    %v121 = vpop.permute.xlu0 %120
    %124 = vset.pattern.permute.xlu0 0
    %125 = vperm.xlu0 %124, %v71
    %v126 = vpop.permute.xlu0 %125
    %129 = vset.pattern.permute.xlu0 0
    %130 = vperm.xlu0 %129, %v72
    %v131 = vpop.permute.xlu0 %130
    %134 = vset.pattern.permute.xlu0 0
    %135 = vperm.xlu0 %134, %v73
    %v136 = vpop.permute.xlu0 %135
    %139 = vset.pattern.permute.xlu0 0
    %140 = vperm.xlu0 %139, %v74
    %v141 = vpop.permute.xlu0 %140
    %144 = vset.pattern.permute.xlu0 0
    %145 = vperm.xlu0 %144, %v75
    %v146 = vpop.permute.xlu0 %145
    %149 = vset.pattern.permute.xlu0 0
    %150 = vperm.xlu0 %149, %v76
    %v151 = vpop.permute.xlu0 %150
    %154 = vset.pattern.permute.xlu0 0
    %155 = vperm.xlu0 %154, %v77
    %v156 = vpop.permute.xlu0 %155
    %159 = vset.pattern.permute.xlu0 0
    %160 = vperm.xlu0 %159, %v78
    %v161 = vpop.permute.xlu0 %160
    %164 = vset.pattern.permute.xlu0 0
    %165 = vperm.xlu0 %164, %v79
    %v166 = vpop.permute.xlu0 %165
    %169 = vset.pattern.permute.xlu0 0
    %170 = vperm.xlu0 %169, %v80
    %v171 = vpop.permute.xlu0 %170
    %174 = vset.pattern.permute.xlu0 0
    %175 = vperm.xlu0 %174, %v81
    %v176 = vpop.permute.xlu0 %175
    %179 = vset.pattern.permute.xlu0 0
    %180 = vperm.xlu0 %179, %v82
    %v181 = vpop.permute.xlu0 %180
    %184 = vset.pattern.permute.xlu0 0
    %185 = vperm.xlu0 %184, %v83
    %v186 = vpop.permute.xlu0 %185
    %189 = vset.pattern.permute.xlu0 0
    %190 = vperm.xlu0 %189, %v84
    %v191 = vpop.permute.xlu0 %190
    %194 = vset.pattern.permute.xlu0 0
    %195 = vperm.xlu0 %194, %v85
    %v196 = vpop.permute.xlu0 %195
    %199 = vset.pattern.permute.xlu0 0
    %200 = vperm.xlu0 %199, %v86
    %v201 = vpop.permute.xlu0 %200
    %204 = vset.pattern.permute.xlu0 0
    %205 = vperm.xlu0 %204, %v87
    %v206 = vpop.permute.xlu0 %205
    %209 = vset.pattern.permute.xlu0 0
    %210 = vperm.xlu0 %209, %v88
    %v211 = vpop.permute.xlu0 %210
    %214 = vset.pattern.permute.xlu0 0
    %215 = vperm.xlu0 %214, %v89
    %v216 = vpop.permute.xlu0 %215
    %219 = vset.pattern.permute.xlu0 0
    %220 = vperm.xlu0 %219, %v90
    %v221 = vpop.permute.xlu0 %220
    %224 = vset.pattern.permute.xlu0 0
    %225 = vperm.xlu0 %224, %v91
    %v226 = vpop.permute.xlu0 %225
    %229 = vset.pattern.permute.xlu0 0
    %230 = vperm.xlu0 %229, %v92
    %v231 = vpop.permute.xlu0 %230
    %234 = vset.pattern.permute.xlu0 0
    %235 = vperm.xlu0 %234, %v93
    %v236 = vpop.permute.xlu0 %235
    %239 = vset.pattern.permute.xlu0 0
    %240 = vperm.xlu0 %239, %v94
    %v241 = vpop.permute.xlu0 %240
    %244 = vset.pattern.permute.xlu0 0
    %245 = vperm.xlu0 %244, %v95
    %v246 = vpop.permute.xlu0 %245
    %249 = vset.pattern.permute.xlu0 0
    %250 = vperm.xlu0 %249, %v96
    %v251 = vpop.permute.xlu0 %250
    %254 = vset.pattern.permute.xlu0 0
    %255 = vperm.xlu0 %254, %v97
    %v256 = vpop.permute.xlu0 %255
    %v290 = vunpack.c.l.b16 %v34
    %v291 = vunpack.c.l.b16 %v35
    %v292 = vunpack.c.l.b16 %v36
    %v293 = vunpack.c.l.b16 %v37
    %v294 = vunpack.c.l.b16 %v38
    %v295 = vunpack.c.l.b16 %v39
    %v296 = vunpack.c.l.b16 %v40
    %v297 = vunpack.c.l.b16 %v41
    %v298 = vunpack.c.l.b16 %v42
    %v299 = vunpack.c.l.b16 %v43
    %v300 = vunpack.c.l.b16 %v44
    %v301 = vunpack.c.l.b16 %v45
    %v302 = vunpack.c.l.b16 %v46
    %v303 = vunpack.c.l.b16 %v47
    %v304 = vunpack.c.l.b16 %v48
    %v305 = vunpack.c.l.b16 %v49
    %v306 = vunpack.c.l.b16 %v50
    %v307 = vunpack.c.l.b16 %v51
    %v308 = vunpack.c.l.b16 %v52
    %v309 = vunpack.c.l.b16 %v53
    %v310 = vunpack.c.l.b16 %v54
    %v311 = vunpack.c.l.b16 %v55
    %v312 = vunpack.c.l.b16 %v56
    %v313 = vunpack.c.l.b16 %v57
    %v314 = vunpack.c.l.b16 %v58
    %v315 = vunpack.c.l.b16 %v59
    %v316 = vunpack.c.l.b16 %v60
    %v317 = vunpack.c.l.b16 %v61
    %v318 = vunpack.c.l.b16 %v62
    %v319 = vunpack.c.l.b16 %v63
    %v320 = vunpack.c.l.b16 %v64
    %v321 = vunpack.c.l.b16 %v65
    %v322 = vpack.c.b16 %v291, %v290
    %v323 = vpack.c.b16 %v293, %v292
    %v324 = vpack.c.b16 %v295, %v294
    %v325 = vpack.c.b16 %v297, %v296
    %v326 = vpack.c.b16 %v299, %v298
    %v327 = vpack.c.b16 %v301, %v300
    %v328 = vpack.c.b16 %v303, %v302
    %v329 = vpack.c.b16 %v305, %v304
    %v330 = vpack.c.b16 %v307, %v306
    %v331 = vpack.c.b16 %v309, %v308
    %v332 = vpack.c.b16 %v311, %v310
    %v333 = vpack.c.b16 %v313, %v312
    %v334 = vpack.c.b16 %v315, %v314
    %v335 = vpack.c.b16 %v317, %v316
    %v336 = vpack.c.b16 %v319, %v318
    %v337 = vpack.c.b16 %v321, %v320
    %v342 = vunpack.c.l.b16 %v30
    %v343 = vunpack.c.l.b16 %v31
    %v344 = vunpack.c.l.b16 %v32
    %v345 = vunpack.c.l.b16 %v33
    %v346 = vpack.c.b16 %v343, %v342
    %v347 = vpack.c.b16 %v345, %v344
    %vm349 = vcmask 236544
    %v351 = vsel %vm349, %v322, 0
    %v354 = vsel %vm349, %v323, 0
    %v357 = vsel %vm349, %v324, 0
    %v360 = vsel %vm349, %v325, 0
    %v363 = vsel %vm349, %v326, 0
    %v366 = vsel %vm349, %v327, 0
    %v369 = vsel %vm349, %v328, 0
    %v372 = vsel %vm349, %v329, 0
    %v375 = vsel %vm349, %v330, 0
    %v378 = vsel %vm349, %v331, 0
    %v381 = vsel %vm349, %v332, 0
    %v384 = vsel %vm349, %v333, 0
    %v387 = vsel %vm349, %v334, 0
    %v390 = vsel %vm349, %v335, 0
    %v393 = vsel %vm349, %v336, 0
    %v396 = vsel %vm349, %v337, 0
    %vm398 = vcmask 1045504
    %vm399 = vcmask 1046528
    %v400 = vsel %vm398, 4294967295, 65535
    %v401 = vsel %vm399, %v400, 0
    %v403 = vand.u32 %v347, %v401
    %405 = vmatprep.subr.bf16.mxu0 0
    %406 = vmatpush1.bf16.msra.mxu0 0
    %407 = vmatprep.subr.bf16.mxu0 0
    %408 = vmatpush1.bf16.msra.mxu0 0
    %409 = vmatprep.subr.bf16.mxu0 0
    %410 = vmatpush1.bf16.msra.mxu0 0
    %411 = vmatprep.subr.bf16.mxu0 0
    %412 = vmatpush1.bf16.msra.mxu0 0
    %413 = vmatprep.subr.bf16.mxu0 0
    %414 = vmatpush1.bf16.msra.mxu0 0
    %415 = vmatprep.subr.bf16.mxu0 0
    %416 = vmatpush1.bf16.msra.mxu0 0
    %417 = vmatprep.subr.bf16.mxu0 0
    %418 = vmatpush1.bf16.msra.mxu0 %v403
    %419 = vmatprep.subr.bf16.mxu0 0
    %420 = vmatpush1.bf16.msra.mxu0 %v346
    %421 = vmatprep.subr.bf16.mxu0 0
    %422 = vmatpush2.bf16.msra.mxu0 0
    %423 = vmatprep.subr.bf16.mxu0 0
    %424 = vmatpush2.bf16.msra.mxu0 0
    %425 = vmatprep.subr.bf16.mxu0 0
    %426 = vmatpush2.bf16.msra.mxu0 0
    %427 = vmatprep.subr.bf16.mxu0 0
    %428 = vmatpush2.bf16.msra.mxu0 0
    %429 = vmatprep.subr.bf16.mxu0 0
    %430 = vmatpush2.bf16.msra.mxu0 0
    %431 = vmatprep.subr.bf16.mxu0 0
    %432 = vmatpush2.bf16.msra.mxu0 0
    %433 = vmatprep.subr.bf16.mxu0 0
    %434 = vmatpush2.bf16.msra.mxu0 0
    %435 = vmatprep.subr.bf16.mxu0 0
    %436 = vmatpush2.bf16.msra.mxu0 0
    %437 = vmatprep.mubr.bf16.mxu0 0
    %438 = vmatmul.mubr.bf16.gmra.mxu0 %v351
    %v439 = vpop.f32.mrf.mxu0
    %v440 = vadd.f32 %v101, %v439
    %v441 = vpop.f32.mrf.mxu0
    %v442 = vpop.f32.mrf.mxu0
    %v443 = vadd.f32 %v106, %v442
    %v444 = vpop.f32.mrf.mxu0
    %445 = vmatprep.mubr.bf16.mxu0 0
    %446 = vmatmul.mubr.bf16.gmra.mxu0 %v354
    %v447 = vpop.f32.mrf.mxu0
    %v448 = vadd.f32 %v111, %v447
    %v449 = vpop.f32.mrf.mxu0
    %v450 = vpop.f32.mrf.mxu0
    %v451 = vadd.f32 %v116, %v450
    %v452 = vpop.f32.mrf.mxu0
    %453 = vmatprep.mubr.bf16.mxu0 0
    %454 = vmatmul.mubr.bf16.gmra.mxu0 %v357
    %v455 = vpop.f32.mrf.mxu0
    %v456 = vadd.f32 %v121, %v455
    %v457 = vpop.f32.mrf.mxu0
    %v458 = vpop.f32.mrf.mxu0
    %v459 = vadd.f32 %v126, %v458
    %v460 = vpop.f32.mrf.mxu0
    %461 = vmatprep.mubr.bf16.mxu0 0
    %462 = vmatmul.mubr.bf16.gmra.mxu0 %v360
    %v463 = vpop.f32.mrf.mxu0
    %v464 = vadd.f32 %v131, %v463
    %v465 = vpop.f32.mrf.mxu0
    %v466 = vpop.f32.mrf.mxu0
    %v467 = vadd.f32 %v136, %v466
    %v468 = vpop.f32.mrf.mxu0
    %469 = vmatprep.mubr.bf16.mxu0 0
    %470 = vmatmul.mubr.bf16.gmra.mxu0 %v363
    %v471 = vpop.f32.mrf.mxu0
    %v472 = vadd.f32 %v141, %v471
    %v473 = vpop.f32.mrf.mxu0
    %v474 = vpop.f32.mrf.mxu0
    %v475 = vadd.f32 %v146, %v474
    %v476 = vpop.f32.mrf.mxu0
    %477 = vmatprep.mubr.bf16.mxu0 0
    %478 = vmatmul.mubr.bf16.gmra.mxu0 %v366
    %v479 = vpop.f32.mrf.mxu0
    %v480 = vadd.f32 %v151, %v479
    %v481 = vpop.f32.mrf.mxu0
    %v482 = vpop.f32.mrf.mxu0
    %v483 = vadd.f32 %v156, %v482
    %v484 = vpop.f32.mrf.mxu0
    %485 = vmatprep.mubr.bf16.mxu0 0
    %486 = vmatmul.mubr.bf16.gmra.mxu0 %v369
    %v487 = vpop.f32.mrf.mxu0
    %v488 = vadd.f32 %v161, %v487
    %v489 = vpop.f32.mrf.mxu0
    %v490 = vpop.f32.mrf.mxu0
    %v491 = vadd.f32 %v166, %v490
    %v492 = vpop.f32.mrf.mxu0
    %493 = vmatprep.mubr.bf16.mxu0 0
    %494 = vmatmul.mubr.bf16.gmra.mxu0 %v372
    %v495 = vpop.f32.mrf.mxu0
    %v496 = vadd.f32 %v171, %v495
    %v497 = vpop.f32.mrf.mxu0
    %v498 = vpop.f32.mrf.mxu0
    %v499 = vadd.f32 %v176, %v498
    %v500 = vpop.f32.mrf.mxu0
    %501 = vmatprep.mubr.bf16.mxu0 0
    %502 = vmatmul.mubr.bf16.gmra.mxu0 %v375
    %v503 = vpop.f32.mrf.mxu0
    %v504 = vadd.f32 %v181, %v503
    %v505 = vpop.f32.mrf.mxu0
    %v506 = vpop.f32.mrf.mxu0
    %v507 = vadd.f32 %v186, %v506
    %v508 = vpop.f32.mrf.mxu0
    %509 = vmatprep.mubr.bf16.mxu0 0
    %510 = vmatmul.mubr.bf16.gmra.mxu0 %v378
    %v511 = vpop.f32.mrf.mxu0
    %v512 = vadd.f32 %v191, %v511
    %v513 = vpop.f32.mrf.mxu0
    %v514 = vpop.f32.mrf.mxu0
    %v515 = vadd.f32 %v196, %v514
    %v516 = vpop.f32.mrf.mxu0
    %517 = vmatprep.mubr.bf16.mxu0 0
    %518 = vmatmul.mubr.bf16.gmra.mxu0 %v381
    %v519 = vpop.f32.mrf.mxu0
    %v520 = vadd.f32 %v201, %v519
    %v521 = vpop.f32.mrf.mxu0
    %v522 = vpop.f32.mrf.mxu0
    %v523 = vadd.f32 %v206, %v522
    %v524 = vpop.f32.mrf.mxu0
    %525 = vmatprep.mubr.bf16.mxu0 0
    %526 = vmatmul.mubr.bf16.gmra.mxu0 %v384
    %v527 = vpop.f32.mrf.mxu0
    %v528 = vadd.f32 %v211, %v527
    %v529 = vpop.f32.mrf.mxu0
    %v530 = vpop.f32.mrf.mxu0
    %v531 = vadd.f32 %v216, %v530
    %v532 = vpop.f32.mrf.mxu0
    %533 = vmatprep.mubr.bf16.mxu0 0
    %534 = vmatmul.mubr.bf16.gmra.mxu0 %v387
    %v535 = vpop.f32.mrf.mxu0
    %v536 = vadd.f32 %v221, %v535
    %v537 = vpop.f32.mrf.mxu0
    %v538 = vpop.f32.mrf.mxu0
    %v539 = vadd.f32 %v226, %v538
    %v540 = vpop.f32.mrf.mxu0
    %541 = vmatprep.mubr.bf16.mxu0 0
    %542 = vmatmul.mubr.bf16.gmra.mxu0 %v390
    %v543 = vpop.f32.mrf.mxu0
    %v544 = vadd.f32 %v231, %v543
    %v545 = vpop.f32.mrf.mxu0
    %v546 = vpop.f32.mrf.mxu0
    %v547 = vadd.f32 %v236, %v546
    %v548 = vpop.f32.mrf.mxu0
    %549 = vmatprep.mubr.bf16.mxu0 0
    %550 = vmatmul.mubr.bf16.gmra.mxu0 %v393
    %v551 = vpop.f32.mrf.mxu0
    %v552 = vadd.f32 %v241, %v551
    %v553 = vpop.f32.mrf.mxu0
    %v554 = vpop.f32.mrf.mxu0
    %v555 = vadd.f32 %v246, %v554
    %v556 = vpop.f32.mrf.mxu0
    %557 = vmatprep.mubr.bf16.mxu0 0
    %558 = vmatmul.mubr.bf16.gmra.mxu0 %v396
    %v559 = vpop.f32.mrf.mxu0
    %v560 = vadd.f32 %v251, %v559
    %v561 = vpop.f32.mrf.mxu0
    %v562 = vpop.f32.mrf.mxu0
    %v563 = vadd.f32 %v256, %v562
    %v564 = vpop.f32.mrf.mxu0
    %565 = vdwg.mxu0
    %v566 = vmax.f32 %v440, 0.0
    %v567 = vmax.f32 %v443, 0.0
    %v568 = vmax.f32 %v448, 0.0
    %v569 = vmax.f32 %v451, 0.0
    %v570 = vmax.f32 %v456, 0.0
    %v571 = vmax.f32 %v459, 0.0
    %v572 = vmax.f32 %v464, 0.0
    %v573 = vmax.f32 %v467, 0.0
    %v574 = vmax.f32 %v472, 0.0
    %v575 = vmax.f32 %v475, 0.0
    %v576 = vmax.f32 %v480, 0.0
    %v577 = vmax.f32 %v483, 0.0
    %v578 = vmax.f32 %v488, 0.0
    %v579 = vmax.f32 %v491, 0.0
    %v580 = vmax.f32 %v496, 0.0
    %v581 = vmax.f32 %v499, 0.0
    %v582 = vmax.f32 %v504, 0.0
    %v583 = vmax.f32 %v507, 0.0
    %v584 = vmax.f32 %v512, 0.0
    %v585 = vmax.f32 %v515, 0.0
    %v586 = vmax.f32 %v520, 0.0
    %v587 = vmax.f32 %v523, 0.0
    %v588 = vmax.f32 %v528, 0.0
    %v589 = vmax.f32 %v531, 0.0
    %v590 = vmax.f32 %v536, 0.0
    %v591 = vmax.f32 %v539, 0.0
    %v592 = vmax.f32 %v544, 0.0
    %v593 = vmax.f32 %v547, 0.0
    %v594 = vmax.f32 %v552, 0.0
    %v595 = vmax.f32 %v555, 0.0
    %v596 = vmax.f32 %v560, 0.0
    %v597 = vmax.f32 %v563, 0.0
    %v598 = vld [vmem:[%s3] sm:$0xff]
    %v599 = vld [vmem:[%s3 + $0x8] sm:$0xff]
    %v600 = vld [vmem:[%s3 + $0x10] sm:$0xff]
    %v601 = vld [vmem:[%s3 + $0x18] sm:$0xff]
    %v602 = vld [vmem:[%s3 + $0x20] sm:$0xff]
    %v603 = vld [vmem:[%s3 + $0x28] sm:$0xff]
    %v604 = vld [vmem:[%s3 + $0x30] sm:$0xff]
    %v605 = vld [vmem:[%s3 + $0x38] sm:$0xff]
    %v606 = vld [vmem:[%s3 + $0x40] sm:$0xff]
    %v607 = vld [vmem:[%s3 + $0x48] sm:$0xff]
    %v608 = vld [vmem:[%s3 + $0x50] sm:$0xff]
    %v609 = vld [vmem:[%s3 + $0x58] sm:$0xff]
    %v610 = vld [vmem:[%s3 + $0x60] sm:$0xff]
    %v611 = vld [vmem:[%s3 + $0x68] sm:$0xff]
    %v612 = vld [vmem:[%s3 + $0x70] sm:$0xff]
    %v613 = vld [vmem:[%s3 + $0x78] sm:$0xff]
    %v614 = vpack.c.bf16 %v567, %v566
    %v615 = vpack.c.bf16 %v569, %v568
    %v616 = vpack.c.bf16 %v571, %v570
    %v617 = vpack.c.bf16 %v573, %v572
    %v618 = vpack.c.bf16 %v575, %v574
    %v619 = vpack.c.bf16 %v577, %v576
    %v620 = vpack.c.bf16 %v579, %v578
    %v621 = vpack.c.bf16 %v581, %v580
    %v622 = vpack.c.bf16 %v583, %v582
    %v623 = vpack.c.bf16 %v585, %v584
    %v624 = vpack.c.bf16 %v587, %v586
    %v625 = vpack.c.bf16 %v589, %v588
    %v626 = vpack.c.bf16 %v591, %v590
    %v627 = vpack.c.bf16 %v593, %v592
    %v628 = vpack.c.bf16 %v595, %v594
    %v629 = vpack.c.bf16 %v597, %v596
    %v630 = vld [vmem:[%s4] sm:$0xff]
    %v631 = vld [vmem:[%s4 + $0x8] sm:$0xff]
    %v632 = vld [vmem:[%s4 + $0x10] sm:$0xff]
    %v633 = vld [vmem:[%s4 + $0x18] sm:$0xff]
    %v634 = vld [vmem:[%s4 + $0x20] sm:$0xff]
    %v635 = vld [vmem:[%s4 + $0x28] sm:$0xff]
    %v636 = vld [vmem:[%s4 + $0x30] sm:$0xff]
    %v637 = vld [vmem:[%s4 + $0x38] sm:$0xff]
    %v638 = vld [vmem:[%s4 + $0x40] sm:$0xff]
    %v639 = vld [vmem:[%s4 + $0x48] sm:$0xff]
    %v640 = vld [vmem:[%s4 + $0x50] sm:$0xff]
    %v641 = vld [vmem:[%s4 + $0x58] sm:$0xff]
    %v642 = vld [vmem:[%s4 + $0x60] sm:$0xff]
    %v643 = vld [vmem:[%s4 + $0x68] sm:$0xff]
    %v644 = vld [vmem:[%s4 + $0x70] sm:$0xff]
    %v645 = vld [vmem:[%s4 + $0x78] sm:$0xff]
    %647 = vset.pattern.permute.xlu0 0
    %648 = vperm.xlu0 %647, %v630
    %v649 = vpop.permute.xlu0 %648
    %652 = vset.pattern.permute.xlu0 0
    %653 = vperm.xlu0 %652, %v631
    %v654 = vpop.permute.xlu0 %653
    %657 = vset.pattern.permute.xlu0 0
    %658 = vperm.xlu0 %657, %v632
    %v659 = vpop.permute.xlu0 %658
    %662 = vset.pattern.permute.xlu0 0
    %663 = vperm.xlu0 %662, %v633
    %v664 = vpop.permute.xlu0 %663
    %667 = vset.pattern.permute.xlu0 0
    %668 = vperm.xlu0 %667, %v634
    %v669 = vpop.permute.xlu0 %668
    %672 = vset.pattern.permute.xlu0 0
    %673 = vperm.xlu0 %672, %v635
    %v674 = vpop.permute.xlu0 %673
    %677 = vset.pattern.permute.xlu0 0
    %678 = vperm.xlu0 %677, %v636
    %v679 = vpop.permute.xlu0 %678
    %682 = vset.pattern.permute.xlu0 0
    %683 = vperm.xlu0 %682, %v637
    %v684 = vpop.permute.xlu0 %683
    %687 = vset.pattern.permute.xlu0 0
    %688 = vperm.xlu0 %687, %v638
    %v689 = vpop.permute.xlu0 %688
    %692 = vset.pattern.permute.xlu0 0
    %693 = vperm.xlu0 %692, %v639
    %v694 = vpop.permute.xlu0 %693
    %697 = vset.pattern.permute.xlu0 0
    %698 = vperm.xlu0 %697, %v640
    %v699 = vpop.permute.xlu0 %698
    %702 = vset.pattern.permute.xlu0 0
    %703 = vperm.xlu0 %702, %v641
    %v704 = vpop.permute.xlu0 %703
    %707 = vset.pattern.permute.xlu0 0
    %708 = vperm.xlu0 %707, %v642
    %v709 = vpop.permute.xlu0 %708
    %712 = vset.pattern.permute.xlu0 0
    %713 = vperm.xlu0 %712, %v643
    %v714 = vpop.permute.xlu0 %713
    %717 = vset.pattern.permute.xlu0 0
    %718 = vperm.xlu0 %717, %v644
    %v719 = vpop.permute.xlu0 %718
    %722 = vset.pattern.permute.xlu0 0
    %723 = vperm.xlu0 %722, %v645
    %v724 = vpop.permute.xlu0 %723
    %v742 = vunpack.c.l.b16 %v598
    %v743 = vunpack.c.h.b16 %v598
    %v744 = vunpack.c.l.b16 %v599
    %v745 = vunpack.c.h.b16 %v599
    %v746 = vunpack.c.l.b16 %v600
    %v747 = vunpack.c.h.b16 %v600
    %v748 = vunpack.c.l.b16 %v601
    %v749 = vunpack.c.h.b16 %v601
    %v750 = vunpack.c.l.b16 %v602
    %v751 = vunpack.c.h.b16 %v602
    %v752 = vunpack.c.l.b16 %v603
    %v753 = vunpack.c.h.b16 %v603
    %v754 = vunpack.c.l.b16 %v604
    %v755 = vunpack.c.h.b16 %v604
    %v756 = vunpack.c.l.b16 %v605
    %v757 = vunpack.c.h.b16 %v605
    %v758 = vunpack.c.l.b16 %v606
    %v759 = vunpack.c.h.b16 %v606
    %v760 = vunpack.c.l.b16 %v607
    %v761 = vunpack.c.h.b16 %v607
    %v762 = vunpack.c.l.b16 %v608
    %v763 = vunpack.c.h.b16 %v608
    %v764 = vunpack.c.l.b16 %v609
    %v765 = vunpack.c.h.b16 %v609
    %v766 = vunpack.c.l.b16 %v610
    %v767 = vunpack.c.h.b16 %v610
    %v768 = vunpack.c.l.b16 %v611
    %v769 = vunpack.c.h.b16 %v611
    %v770 = vunpack.c.l.b16 %v612
    %v771 = vunpack.c.h.b16 %v612
    %v772 = vunpack.c.l.b16 %v613
    %v773 = vunpack.c.h.b16 %v613
    %v774 = vpack.c.b16 %v744, %v742
    %v775 = vpack.c.b16 %v745, %v743
    %v776 = vpack.c.b16 %v748, %v746
    %v777 = vpack.c.b16 %v749, %v747
    %v778 = vpack.c.b16 %v752, %v750
    %v779 = vpack.c.b16 %v753, %v751
    %v780 = vpack.c.b16 %v756, %v754
    %v781 = vpack.c.b16 %v757, %v755
    %v782 = vpack.c.b16 %v760, %v758
    %v783 = vpack.c.b16 %v761, %v759
    %v784 = vpack.c.b16 %v764, %v762
    %v785 = vpack.c.b16 %v765, %v763
    %v786 = vpack.c.b16 %v768, %v766
    %v787 = vpack.c.b16 %v769, %v767
    %v788 = vpack.c.b16 %v772, %v770
    %v789 = vpack.c.b16 %v773, %v771
    %806 = vmatprep.subr.bf16.mxu0 0
    %807 = vmatpush1.bf16.msra.mxu0 %v621
    %808 = vmatprep.subr.bf16.mxu0 0
    %809 = vmatpush1.bf16.msra.mxu0 %v620
    %810 = vmatprep.subr.bf16.mxu0 0
    %811 = vmatpush1.bf16.msra.mxu0 %v619
    %812 = vmatprep.subr.bf16.mxu0 0
    %813 = vmatpush1.bf16.msra.mxu0 %v618
    %814 = vmatprep.subr.bf16.mxu0 0
    %815 = vmatpush1.bf16.msra.mxu0 %v617
    %816 = vmatprep.subr.bf16.mxu0 0
    %817 = vmatpush1.bf16.msra.mxu0 %v616
    %818 = vmatprep.subr.bf16.mxu0 0
    %819 = vmatpush1.bf16.msra.mxu0 %v615
    %820 = vmatprep.subr.bf16.mxu0 0
    %821 = vmatpush1.bf16.msra.mxu0 %v614
    %822 = vmatprep.subr.bf16.mxu0 0
    %823 = vmatpush2.bf16.msra.mxu0 %v629
    %824 = vmatprep.subr.bf16.mxu0 0
    %825 = vmatpush2.bf16.msra.mxu0 %v628
    %826 = vmatprep.subr.bf16.mxu0 0
    %827 = vmatpush2.bf16.msra.mxu0 %v627
    %828 = vmatprep.subr.bf16.mxu0 0
    %829 = vmatpush2.bf16.msra.mxu0 %v626
    %830 = vmatprep.subr.bf16.mxu0 0
    %831 = vmatpush2.bf16.msra.mxu0 %v625
    %832 = vmatprep.subr.bf16.mxu0 0
    %833 = vmatpush2.bf16.msra.mxu0 %v624
    %834 = vmatprep.subr.bf16.mxu0 0
    %835 = vmatpush2.bf16.msra.mxu0 %v623
    %836 = vmatprep.subr.bf16.mxu0 0
    %837 = vmatpush2.bf16.msra.mxu0 %v622
    %838 = vmatprep.mubr.bf16.mxu0 %v775
    %839 = vmatmul.mubr.bf16.gmra.mxu0 %v774
    %v840 = vpop.f32.mrf.mxu0
    %v841 = vadd.f32 %v649, %v840
    %v842 = vpop.f32.mrf.mxu0
    %v843 = vpop.f32.mrf.mxu0
    %v844 = vadd.f32 %v654, %v843
    %v845 = vpop.f32.mrf.mxu0
    %846 = vmatprep.mubr.bf16.mxu0 %v777
    %847 = vmatmul.mubr.bf16.gmra.mxu0 %v776
    %v848 = vpop.f32.mrf.mxu0
    %v849 = vadd.f32 %v659, %v848
    %v850 = vpop.f32.mrf.mxu0
    %v851 = vpop.f32.mrf.mxu0
    %v852 = vadd.f32 %v664, %v851
    %v853 = vpop.f32.mrf.mxu0
    %854 = vmatprep.mubr.bf16.mxu0 %v779
    %855 = vmatmul.mubr.bf16.gmra.mxu0 %v778
    %v856 = vpop.f32.mrf.mxu0
    %v857 = vadd.f32 %v669, %v856
    %v858 = vpop.f32.mrf.mxu0
    %v859 = vpop.f32.mrf.mxu0
    %v860 = vadd.f32 %v674, %v859
    %v861 = vpop.f32.mrf.mxu0
    %862 = vmatprep.mubr.bf16.mxu0 %v781
    %863 = vmatmul.mubr.bf16.gmra.mxu0 %v780
    %v864 = vpop.f32.mrf.mxu0
    %v865 = vadd.f32 %v679, %v864
    %v866 = vpop.f32.mrf.mxu0
    %v867 = vpop.f32.mrf.mxu0
    %v868 = vadd.f32 %v684, %v867
    %v869 = vpop.f32.mrf.mxu0
    %870 = vmatprep.mubr.bf16.mxu0 %v783
    %871 = vmatmul.mubr.bf16.gmra.mxu0 %v782
    %v872 = vpop.f32.mrf.mxu0
    %v873 = vadd.f32 %v689, %v872
    %v874 = vpop.f32.mrf.mxu0
    %v875 = vpop.f32.mrf.mxu0
    %v876 = vadd.f32 %v694, %v875
    %v877 = vpop.f32.mrf.mxu0
    %878 = vmatprep.mubr.bf16.mxu0 %v785
    %879 = vmatmul.mubr.bf16.gmra.mxu0 %v784
    %v880 = vpop.f32.mrf.mxu0
    %v881 = vadd.f32 %v699, %v880
    %v882 = vpop.f32.mrf.mxu0
    %v883 = vpop.f32.mrf.mxu0
    %v884 = vadd.f32 %v704, %v883
    %v885 = vpop.f32.mrf.mxu0
    %886 = vmatprep.mubr.bf16.mxu0 %v787
    %887 = vmatmul.mubr.bf16.gmra.mxu0 %v786
    %v888 = vpop.f32.mrf.mxu0
    %v889 = vadd.f32 %v709, %v888
    %v890 = vpop.f32.mrf.mxu0
    %v891 = vpop.f32.mrf.mxu0
    %v892 = vadd.f32 %v714, %v891
    %v893 = vpop.f32.mrf.mxu0
    %894 = vmatprep.mubr.bf16.mxu0 %v789
    %895 = vmatmul.mubr.bf16.gmra.mxu0 %v788
    %v896 = vpop.f32.mrf.mxu0
    %v897 = vadd.f32 %v719, %v896
    %v898 = vpop.f32.mrf.mxu0
    %v899 = vpop.f32.mrf.mxu0
    %v900 = vadd.f32 %v724, %v899
    %v901 = vpop.f32.mrf.mxu0
    %902 = vdwg.mxu0
    %v903 = vmax.f32 %v841, 0.0
    %v904 = vmax.f32 %v844, 0.0
    %v905 = vmax.f32 %v849, 0.0
    %v906 = vmax.f32 %v852, 0.0
    %v907 = vmax.f32 %v857, 0.0
    %v908 = vmax.f32 %v860, 0.0
    %v909 = vmax.f32 %v865, 0.0
    %v910 = vmax.f32 %v868, 0.0
    %v911 = vmax.f32 %v873, 0.0
    %v912 = vmax.f32 %v876, 0.0
    %v913 = vmax.f32 %v881, 0.0
    %v914 = vmax.f32 %v884, 0.0
    %v915 = vmax.f32 %v889, 0.0
    %v916 = vmax.f32 %v892, 0.0
    %v917 = vmax.f32 %v897, 0.0
    %v918 = vmax.f32 %v900, 0.0
    %v919 = vld [vmem:[%s5] sm:$0xff]
    %v920 = vld [vmem:[%s5 + $0x8] sm:$0xff]
    %v921 = vld [vmem:[%s5 + $0x10] sm:$0xff]
    %v922 = vld [vmem:[%s5 + $0x18] sm:$0xff]
    %v923 = vld [vmem:[%s5 + $0x20] sm:$0xff]
    %v924 = vld [vmem:[%s5 + $0x28] sm:$0xff]
    %v925 = vld [vmem:[%s5 + $0x30] sm:$0xff]
    %v926 = vld [vmem:[%s5 + $0x38] sm:$0xff]
    %v927 = vld [vmem:[%s5 + $0x40] sm:$0xff]
    %v928 = vld [vmem:[%s5 + $0x48] sm:$0xff]
    %v929 = vld [vmem:[%s5 + $0x50] sm:$0xff]
    %v930 = vld [vmem:[%s5 + $0x58] sm:$0xff]
    %v931 = vld [vmem:[%s5 + $0x60] sm:$0xff]
    %v932 = vld [vmem:[%s5 + $0x68] sm:$0xff]
    %v933 = vld [vmem:[%s5 + $0x70] sm:$0xff]
    %v934 = vld [vmem:[%s5 + $0x78] sm:$0xff]
    %936 = vset.pattern.permute.xlu0 0
    %937 = vperm.xlu0 %936, %v919
    %v938 = vpop.permute.xlu0 %937
    %941 = vset.pattern.permute.xlu0 0
    %942 = vperm.xlu0 %941, %v920
    %v943 = vpop.permute.xlu0 %942
    %946 = vset.pattern.permute.xlu0 0
    %947 = vperm.xlu0 %946, %v921
    %v948 = vpop.permute.xlu0 %947
    %951 = vset.pattern.permute.xlu0 0
    %952 = vperm.xlu0 %951, %v922
    %v953 = vpop.permute.xlu0 %952
    %956 = vset.pattern.permute.xlu0 0
    %957 = vperm.xlu0 %956, %v923
    %v958 = vpop.permute.xlu0 %957
    %961 = vset.pattern.permute.xlu0 0
    %962 = vperm.xlu0 %961, %v924
    %v963 = vpop.permute.xlu0 %962
    %966 = vset.pattern.permute.xlu0 0
    %967 = vperm.xlu0 %966, %v925
    %v968 = vpop.permute.xlu0 %967
    %971 = vset.pattern.permute.xlu0 0
    %972 = vperm.xlu0 %971, %v926
    %v973 = vpop.permute.xlu0 %972
    %976 = vset.pattern.permute.xlu0 0
    %977 = vperm.xlu0 %976, %v927
    %v978 = vpop.permute.xlu0 %977
    %981 = vset.pattern.permute.xlu0 0
    %982 = vperm.xlu0 %981, %v928
    %v983 = vpop.permute.xlu0 %982
    %986 = vset.pattern.permute.xlu0 0
    %987 = vperm.xlu0 %986, %v929
    %v988 = vpop.permute.xlu0 %987
    %991 = vset.pattern.permute.xlu0 0
    %992 = vperm.xlu0 %991, %v930
    %v993 = vpop.permute.xlu0 %992
    %996 = vset.pattern.permute.xlu0 0
    %997 = vperm.xlu0 %996, %v931
    %v998 = vpop.permute.xlu0 %997
    %1001 = vset.pattern.permute.xlu0 0
    %1002 = vperm.xlu0 %1001, %v932
    %v1003 = vpop.permute.xlu0 %1002
    %1006 = vset.pattern.permute.xlu0 0
    %1007 = vperm.xlu0 %1006, %v933
    %v1008 = vpop.permute.xlu0 %1007
    %1011 = vset.pattern.permute.xlu0 0
    %1012 = vperm.xlu0 %1011, %v934
    %v1013 = vpop.permute.xlu0 %1012
    %v1015 = vmul.f32 %v903, %v938
    %v1016 = vmul.f32 %v904, %v943
    %v1017 = vmul.f32 %v905, %v948
    %v1018 = vmul.f32 %v906, %v953
    %v1019 = vmul.f32 %v907, %v958
    %v1020 = vmul.f32 %v908, %v963
    %v1021 = vmul.f32 %v909, %v968
    %v1022 = vmul.f32 %v910, %v973
    %v1023 = vmul.f32 %v911, %v978
    %v1024 = vmul.f32 %v912, %v983
    %v1025 = vmul.f32 %v913, %v988
    %v1026 = vmul.f32 %v914, %v993
    %v1027 = vmul.f32 %v915, %v998
    %v1028 = vmul.f32 %v916, %v1003
    %v1029 = vmul.f32 %v917, %v1008
    %v1030 = vmul.f32 %v918, %v1013
    %v1031 = vadd.f32 %v1015, %v1016
    %v1032 = vadd.f32 %v1031, %v1017
    %v1033 = vadd.f32 %v1032, %v1018
    %v1034 = vadd.f32 %v1033, %v1019
    %v1035 = vadd.f32 %v1034, %v1020
    %v1036 = vadd.f32 %v1035, %v1021
    %v1037 = vadd.f32 %v1036, %v1022
    %v1038 = vadd.f32 %v1037, %v1023
    %v1039 = vadd.f32 %v1038, %v1024
    %v1040 = vadd.f32 %v1039, %v1025
    %v1041 = vadd.f32 %v1040, %v1026
    %v1042 = vadd.f32 %v1041, %v1027
    %v1043 = vadd.f32 %v1042, %v1028
    %v1044 = vadd.f32 %v1043, %v1029
    %v1045 = vadd.f32 %v1044, %v1030
    %v1046 = vrot.slane %v1045, 4
    %v1047 = vadd.f32 %v1045, %v1046
    %v1048 = vrot.slane %v1047, 2
    %v1049 = vadd.f32 %v1047, %v1048
    %v1050 = vrot.slane %v1049, 1
    %v1051 = vadd.f32 %v1049, %v1050
    %v1052 = vld [vmem:[#allocation2] sm:$0x1]
    %1054 = vset.pattern.permute.xlu0 0
    %1055 = vperm.xlu0 %1054, %v1052
    %v1056 = vpop.permute.xlu0 %1055
    %v1058 = vlaneseq
    %v1059 = vshrl.u32 %v1058, 7
    %v1060 = vsub.s32 0, %v1059
    %v1061 = vrot.slane %v1056, %v1060
    %v1062 = vadd.f32 %v1051, %v1061
    %1063 = vst [vmem:[#allocation3] sm:$0x1] %v1062
    // Predicated region
    $region30: #{tpu_custom_call.1} parent=1 // pred_check
      _
    $region31: #{tpu_custom_call.1} parent=1 // pred_check_branch
      %1065 = sbr.rel (0) target = $region33
    $region32: #{tpu_custom_call.1} parent=1 // pred_region
      %s1067 = ssub.s32 16, 16
      %1068 = vsyncadd [#allocation4], %s1067
      %s1070 = sshll.u32 [#allocation3], 4
      %s1071 = int_to_ptr.vmem [resolvable:$true] %s1070
      %1073 = dma.vmem_to_hbm [thread:$0]  %s1071, 16, %s7, [#allocation4]
    $region33: #{tpu_custom_call.1} parent=1 // pred_fallthru
      _
    // Predicated region
    $region34: #{tpu_custom_call.1} parent=1 // pred_check
      _
    $region35: #{tpu_custom_call.1} parent=1 // pred_check_branch
      %1075 = sbr.rel (0) target = $region37
    $region36: #{tpu_custom_call.1} parent=1 // pred_region
      %1076 = dma.done [#allocation4], 16
    $region37: #{tpu_custom_call.1} parent=1 // pred_fallthru
      _
    %1077 = vsyncpa [#allocation4], 1

</llo_original>
